<compile_context>
chip_gen: v6e
topology: v6e:2x2x1
jax: 0.10.0
libtpu: 0.0.40
codegen_flags: <defaults>
</compile_context>

<pallas_src>
import functools

import numpy as np
import jax
import jax.numpy as jnp
from jax.experimental import pallas as pl
from jax.experimental.pallas import tpu as pltpu


# ----------------------------- fused Pallas kernel ---------------------------

def decoder_step_kernel(ids_ref, emb_ref, state_in_ref, fc_w_ref, fc_b_ref,
                        *rest):
    """Whole decoder step in one kernel.

    rest = (w_ih_0, w_hh_0, b_0, ..., w_ih_{L-1}, w_hh_{L-1}, b_{L-1},  # inputs
            pred_ref, state_out_ref)                                    # outputs

    state layout (in and out): (N, 2*L*H) packed as [h0 | c0 | h1 | c1 | ...],
    i.e. exactly one lane-dense (N, 128) tile at the test shapes (L=2, H=32).
    """
    num_layers = (len(rest) - 2) // 3
    layer_refs = rest[:3 * num_layers]
    pred_ref, state_out_ref = rest[3 * num_layers:]

    batch = state_in_ref.shape[0]
    H = state_in_ref.shape[1] // (2 * num_layers)

    # Embedding lookup as one_hot @ table: keeps the gather on the MXU with the
    # (tiny) table VMEM-resident; exact for in-range ids.
    # TODO(synk): for production vocab sizes replace with a DMA row gather
    # (PrefetchScalarGridSpec + pl.Element rows, table left in HBM).
    ids = ids_ref[...]                                          # (N, 1) int32
    vocab = emb_ref.shape[0]
    lane_v = jax.lax.broadcasted_iota(jnp.int32, (batch, vocab), 1)
    one_hot = (lane_v == ids).astype(jnp.float32)               # (N, vocab)
    x = jnp.dot(one_hot, emb_ref[...], preferred_element_type=jnp.float32)
    # TODO(synk): training-mode dropout (Bernoulli mask via pltpu PRNG) not
    # implemented; eval semantics -> identity.

    # g-lane (cell-candidate) mask, hoisted out of the layer loop.
    lane_g = jax.lax.broadcasted_iota(jnp.int32, (batch, 4 * H), 1)
    g_mask = (lane_g >= 2 * H) & (lane_g < 3 * H)

    packed_state = []
    for layer in range(num_layers):
        w_ih_ref = layer_refs[3 * layer + 0]
        w_hh_ref = layer_refs[3 * layer + 1]
        b_ref = layer_refs[3 * layer + 2]
        off = 2 * layer * H
        h_prev = state_in_ref[:, off:off + H]                   # (N, H)
        c_prev = state_in_ref[:, off + H:off + 2 * H]           # (N, H)

        # Two MXU pushes instead of concat([x, h]) + one push: the concat was a
        # cross-lane copy sitting on the serial per-layer dependency chain.
        gates = (jnp.dot(x, w_ih_ref[...],
                         preferred_element_type=jnp.float32)
                 + jnp.dot(h_prev, w_hh_ref[...],
                           preferred_element_type=jnp.float32)
                 + b_ref[...])                                  # (N, 4H)

        # Single EUP pass: sigmoid everywhere; tanh(z) = 2*sigmoid(2z) - 1 on
        # the g lanes (replaces a full-tile tanh AND a full-tile sigmoid).
        z = jnp.where(g_mask, gates + gates, gates)
        s = jax.nn.sigmoid(z)
        act = jnp.where(g_mask, s + s - 1.0, s)

        i = act[:, 0 * H:1 * H]
        f = act[:, 1 * H:2 * H]
        g = act[:, 2 * H:3 * H]
        o = act[:, 3 * H:4 * H]
        c_new = f * c_prev + i * g
        h_new = o * jnp.tanh(c_new)

        packed_state.append(h_new)
        packed_state.append(c_new)
        x = h_new  # inter-layer dropout is identity in eval mode

    # One lane-dense (N, 2*L*H) store for the whole new state.
    state_out_ref[...] = jnp.concatenate(packed_state, axis=-1)

    # Final projection, lane-dense (padded) output.
    pred_ref[...] = (jnp.dot(x, fc_w_ref[...],
                             preferred_element_type=jnp.float32)
                     + fc_b_ref[...])


# ----------------------------- wrapper ---------------------------------------

def _pack_state(hidden, cell):
    """(L, N, H) hidden/cell -> (N, 2*L*H) packed [h0 | c0 | h1 | c1 | ...]."""
    parts = []
    for layer in range(hidden.shape[0]):
        parts.append(hidden[layer])
        parts.append(cell[layer])
    return jnp.concatenate(parts, axis=-1)


def _unpack_state(packed, num_layers, H):
    hs = [packed[:, (2 * l + 0) * H:(2 * l + 1) * H] for l in range(num_layers)]
    cs = [packed[:, (2 * l + 1) * H:(2 * l + 2) * H] for l in range(num_layers)]
    return jnp.stack(hs, 0), jnp.stack(cs, 0)


@functools.partial(jax.jit, static_argnames=("output_size",))
def decoder_forward(params, x_ids, hidden, cell, *, output_size):
    """Mirrors Decoder.forward:
         x.unsqueeze(0) -> embedding -> dropout -> LSTM (seq_len=1) -> fc -> squeeze(0)
       Returns (prediction (N, output_size), (hidden, cell) each (L, N, H)).
    """
    N = x_ids.shape[0]
    L, _, H = hidden.shape
    V_pad = params["fc_w"].shape[-1]

    state_in = _pack_state(hidden, cell)                        # (N, 2*L*H)

    vmem = pl.BlockSpec(memory_space=pltpu.MemorySpace.VMEM)
    inputs = [x_ids.reshape(N, 1).astype(jnp.int32),
              params["embedding"], state_in,
              params["fc_w"], params["fc_b"]]
    for layer in range(L):
        inputs.append(params["w_ih"][layer])
        inputs.append(params["w_hh"][layer])
        inputs.append(params["b"][layer])

    pred_pad, state_out = pl.pallas_call(
        decoder_step_kernel,
        out_shape=(jax.ShapeDtypeStruct((N, V_pad), jnp.float32),
                   jax.ShapeDtypeStruct((N, 2 * L * H), jnp.float32)),
        in_specs=[vmem] * len(inputs),
        out_specs=(vmem, vmem),
        # packed state (input 2) is updated in place into output 1: no fresh
        # HBM state allocation/copy per decode step.
        input_output_aliases={2: 1},
    )(*inputs)
    # TODO(synk): for autoregressive generation, fold the token loop in as an
    # "arbitrary" grid axis with constant-index weight BlockSpecs (weights stay
    # VMEM-resident) and carry the packed state in VMEM scratch.
    h_out, c_out = _unpack_state(state_out, L, H)
    return pred_pad[:, :output_size], (h_out, c_out)


# ----------------------------- reference (pure JAX) ---------------------------

def decoder_forward_ref(params, x_ids, hidden, cell, output_size):
    emb = params["embedding"][x_ids]            # exact gather
    H = hidden.shape[-1]
    x = emb
    new_h, new_c = [], []
    for layer in range(hidden.shape[0]):
        gates = (x @ params["w_ih"][layer]
                 + hidden[layer] @ params["w_hh"][layer]
                 + params["b"][layer])
        i = jax.nn.sigmoid(gates[:, 0 * H:1 * H])
        f = jax.nn.sigmoid(gates[:, 1 * H:2 * H])
        g = jnp.tanh(gates[:, 2 * H:3 * H])
        o = jax.nn.sigmoid(gates[:, 3 * H:4 * H])
        c_l = f * cell[layer] + i * g
        h_l = o * jnp.tanh(c_l)
        new_h.append(h_l)
        new_c.append(c_l)
        x = h_l
    pred = x @ params["fc_w"] + params["fc_b"]
    return pred[:, :output_size], (jnp.stack(new_h, 0), jnp.stack(new_c, 0))


# ----------------------------- param init -------------------------------------

def _round_up(x, m):
    return ((x + m - 1) // m) * m


def init_params(key, input_size, embed_size, hidden_size, output_size,
                num_layers, weight_dtype=jnp.float32):
    # weight_dtype=jnp.bfloat16 recommended for v6e/v7x production (f32 here
    # to keep the numerical check against the reference tight).
    ks = jax.random.split(key, 3 + 4 * num_layers)
    k = iter(ks)
    bound = 1.0 / np.sqrt(hidden_size)

    # Embedding table padded on the vocab axis to a sublane multiple; padded
    # rows are never selected (ids < input_size).
    vocab_pad = _round_up(input_size, 8)
    emb = jax.random.normal(next(k), (input_size, embed_size), jnp.float32)
    emb = jnp.pad(emb, ((0, vocab_pad - input_size), (0, 0)))

    params = {"embedding": emb.astype(weight_dtype) if weight_dtype == jnp.float32 else emb,
              "w_ih": [], "w_hh": [], "b": []}
    for layer in range(num_layers):
        in_dim = embed_size if layer == 0 else hidden_size
        w_ih = jax.random.uniform(next(k), (in_dim, 4 * hidden_size),
                                  jnp.float32, -bound, bound)
        w_hh = jax.random.uniform(next(k), (hidden_size, 4 * hidden_size),
                                  jnp.float32, -bound, bound)
        b_ih = jax.random.uniform(next(k), (1, 4 * hidden_size), jnp.float32,
                                  -bound, bound)
        b_hh = jax.random.uniform(next(k), (1, 4 * hidden_size), jnp.float32,
                                  -bound, bound)
        params["w_ih"].append(w_ih.astype(weight_dtype))
        params["w_hh"].append(w_hh.astype(weight_dtype))
        params["b"].append(b_ih + b_hh)   # torch adds both biases

    # fc padded to a 128-lane multiple for dense stores; sliced outside.
    out_pad = _round_up(max(output_size, 128), 128)
    fc_w = jax.random.uniform(next(k), (hidden_size, output_size), jnp.float32,
                              -bound, bound)
    fc_b = jax.random.uniform(next(k), (1, output_size), jnp.float32,
                              -bound, bound)
    params["fc_w"] = jnp.pad(
        fc_w, ((0, 0), (0, out_pad - output_size))).astype(weight_dtype)
    params["fc_b"] = jnp.pad(fc_b, ((0, 0), (0, out_pad - output_size)))
    return params


# ----------------------------- main --------------------------------------------

if __name__ == "__main__":
    # small, module-consistent shapes
    N = 8            # batch
    INPUT_SIZE = 50  # decoder input vocab
    EMBED = 32
    HIDDEN = 32      # 4H == 128 -> gate tile is exactly one vreg lane width
    OUTPUT = 64      # len(english.vocab) stand-in; padded to 128 in-kernel
    LAYERS = 2

    key = jax.random.PRNGKey(0)
    kp, kx, kh, kc = jax.random.split(key, 4)

    params = init_params(kp, INPUT_SIZE, EMBED, HIDDEN, OUTPUT, LAYERS)
    x_ids = jax.random.randint(kx, (N,), 0, INPUT_SIZE, jnp.int32)
    hidden = jax.random.normal(kh, (LAYERS, N, HIDDEN), jnp.float32)
    cell = jax.random.normal(kc, (LAYERS, N, HIDDEN), jnp.float32)

    pred, (h_out, c_out) = decoder_forward(params, x_ids, hidden, cell,
                                           output_size=OUTPUT)
    jax.block_until_ready((pred, h_out, c_out))

    # sanity check against pure-JAX reference
    pred_r, (h_r, c_r) = decoder_forward_ref(params, x_ids, hidden, cell, OUTPUT)
    assert pred.shape == (N, OUTPUT)
    assert h_out.shape == (LAYERS, N, HIDDEN) and c_out.shape == (LAYERS, N, HIDDEN)
    np.testing.assert_allclose(np.asarray(pred), np.asarray(pred_r),
                               rtol=1e-4, atol=1e-4)
    np.testing.assert_allclose(np.asarray(h_out), np.asarray(h_r),
                               rtol=1e-4, atol=1e-4)
    np.testing.assert_allclose(np.asarray(c_out), np.asarray(c_r),
                               rtol=1e-4, atol=1e-4)

    print("KERNEL_OK")
</pallas_src>

<mosaic_0001>
module attributes {stable_mosaic.version = 11 : i64} {
  func.func @decoder_step_kernel(%arg0: memref<8x1xi32, #tpu.memory_space<vmem>>, %arg1: memref<56x32xf32, #tpu.memory_space<vmem>>, %arg2: memref<8x128xf32, #tpu.memory_space<vmem>>, %arg3: memref<32x128xf32, #tpu.memory_space<vmem>>, %arg4: memref<1x128xf32, #tpu.memory_space<vmem>>, %arg5: memref<32x128xf32, #tpu.memory_space<vmem>>, %arg6: memref<32x128xf32, #tpu.memory_space<vmem>>, %arg7: memref<1x128xf32, #tpu.memory_space<vmem>>, %arg8: memref<32x128xf32, #tpu.memory_space<vmem>>, %arg9: memref<32x128xf32, #tpu.memory_space<vmem>>, %arg10: memref<1x128xf32, #tpu.memory_space<vmem>>, %arg11: memref<8x128xf32, #tpu.memory_space<vmem>>, %arg12: memref<8x128xf32, #tpu.memory_space<vmem>>) attributes {dimension_semantics = [], scalar_prefetch = 0 : i64, scratch_operands = 0 : i64, tpu.core_type = #tpu.core_type<tc>} {
    %c0 = arith.constant 0 : index
    %c0_0 = arith.constant 0 : index
    %0 = vector.load %arg0[%c0, %c0_0] : memref<8x1xi32, #tpu.memory_space<vmem>>, vector<8x1xi32>
    %1 = tpu.iota {dimensions = array<i32: 1>} : vector<8x56xi32>
    %2 = vector.broadcast %0 : vector<8x1xi32> to vector<8x56xi32>
    %3 = arith.cmpi eq, %1, %2 : vector<8x56xi32>
    %4 = arith.extui %3 : vector<8x56xi1> to vector<8x56xi32>
    %5 = arith.sitofp %4 : vector<8x56xi32> to vector<8x56xf32>
    %c0_1 = arith.constant 0 : index
    %c0_2 = arith.constant 0 : index
    %6 = vector.load %arg1[%c0_1, %c0_2] : memref<56x32xf32, #tpu.memory_space<vmem>>, vector<56x32xf32>
    %cst = arith.constant dense<0.000000e+00> : vector<8x32xf32>
    %7 = tpu.matmul %5, %6, %cst {dimension_numbers = #tpu.dot_dimension_numbers<[1], [0], [0], [1], [0, 0, 1, 1], [], []>} : vector<8x56xf32>, vector<56x32xf32>, vector<8x32xf32> -> vector<8x32xf32>
    %8 = tpu.iota {dimensions = array<i32: 1>} : vector<8x128xi32>
    %c64_i32 = arith.constant 64 : i32
    %9 = vector.broadcast %c64_i32 : i32 to vector<8x128xi32>
    %10 = arith.cmpi sge, %8, %9 : vector<8x128xi32>
    %c96_i32 = arith.constant 96 : i32
    %11 = vector.broadcast %c96_i32 : i32 to vector<8x128xi32>
    %12 = arith.cmpi slt, %8, %11 : vector<8x128xi32>
    %13 = arith.andi %10, %12 : vector<8x128xi1>
    %c0_3 = arith.constant 0 : index
    %c0_4 = arith.constant 0 : index
    %14 = vector.load %arg2[%c0_3, %c0_4] : memref<8x128xf32, #tpu.memory_space<vmem>>, vector<8x32xf32>
    %c0_5 = arith.constant 0 : index
    %c32 = arith.constant 32 : index
    %15 = vector.load %arg2[%c0_5, %c32] : memref<8x128xf32, #tpu.memory_space<vmem>>, vector<8x32xf32>
    %c0_6 = arith.constant 0 : index
    %c0_7 = arith.constant 0 : index
    %16 = vector.load %arg5[%c0_6, %c0_7] : memref<32x128xf32, #tpu.memory_space<vmem>>, vector<32x128xf32>
    %cst_8 = arith.constant dense<0.000000e+00> : vector<8x128xf32>
    %17 = tpu.matmul %7, %16, %cst_8 {dimension_numbers = #tpu.dot_dimension_numbers<[1], [0], [0], [1], [0, 0, 1, 1], [], []>} : vector<8x32xf32>, vector<32x128xf32>, vector<8x128xf32> -> vector<8x128xf32>
    %c0_9 = arith.constant 0 : index
    %c0_10 = arith.constant 0 : index
    %18 = vector.load %arg6[%c0_9, %c0_10] : memref<32x128xf32, #tpu.memory_space<vmem>>, vector<32x128xf32>
    %cst_11 = arith.constant dense<0.000000e+00> : vector<8x128xf32>
    %19 = tpu.matmul %14, %18, %cst_11 {dimension_numbers = #tpu.dot_dimension_numbers<[1], [0], [0], [1], [0, 0, 1, 1], [], []>} : vector<8x32xf32>, vector<32x128xf32>, vector<8x128xf32> -> vector<8x128xf32>
    %20 = arith.addf %17, %19 : vector<8x128xf32>
    %c0_12 = arith.constant 0 : index
    %c0_13 = arith.constant 0 : index
    %21 = vector.load %arg7[%c0_12, %c0_13] : memref<1x128xf32, #tpu.memory_space<vmem>>, vector<1x128xf32>
    %22 = vector.broadcast %21 : vector<1x128xf32> to vector<8x128xf32>
    %23 = arith.addf %20, %22 : vector<8x128xf32>
    %24 = arith.addf %23, %23 : vector<8x128xf32>
    %25 = arith.select %13, %24, %23 : vector<8x128xi1>, vector<8x128xf32>
    %26 = arith.negf %25 : vector<8x128xf32>
    %27 = math.exp %26 : vector<8x128xf32>
    %cst_14 = arith.constant 1.000000e+00 : f32
    %28 = vector.broadcast %cst_14 : f32 to vector<8x128xf32>
    %29 = arith.addf %28, %27 : vector<8x128xf32>
    %30 = arith.divf %28, %29 : vector<8x128xf32>
    %31 = arith.addf %30, %30 : vector<8x128xf32>
    %cst_15 = arith.constant 1.000000e+00 : f32
    %32 = vector.broadcast %cst_15 : f32 to vector<8x128xf32>
    %33 = arith.subf %31, %32 : vector<8x128xf32>
    %34 = arith.select %13, %33, %30 : vector<8x128xi1>, vector<8x128xf32>
    %35 = vector.extract_strided_slice %34 {offsets = [0, 0], sizes = [8, 32], strides = [1, 1]} : vector<8x128xf32> to vector<8x32xf32>
    %36 = vector.extract_strided_slice %34 {offsets = [0, 32], sizes = [8, 32], strides = [1, 1]} : vector<8x128xf32> to vector<8x32xf32>
    %37 = vector.extract_strided_slice %34 {offsets = [0, 64], sizes = [8, 32], strides = [1, 1]} : vector<8x128xf32> to vector<8x32xf32>
    %38 = vector.extract_strided_slice %34 {offsets = [0, 96], sizes = [8, 32], strides = [1, 1]} : vector<8x128xf32> to vector<8x32xf32>
    %39 = arith.mulf %36, %15 : vector<8x32xf32>
    %40 = arith.mulf %35, %37 : vector<8x32xf32>
    %41 = arith.addf %39, %40 : vector<8x32xf32>
    %42 = math.tanh %41 : vector<8x32xf32>
    %43 = arith.mulf %38, %42 : vector<8x32xf32>
    %c0_16 = arith.constant 0 : index
    %c64 = arith.constant 64 : index
    %44 = vector.load %arg2[%c0_16, %c64] : memref<8x128xf32, #tpu.memory_space<vmem>>, vector<8x32xf32>
    %c0_17 = arith.constant 0 : index
    %c96 = arith.constant 96 : index
    %45 = vector.load %arg2[%c0_17, %c96] : memref<8x128xf32, #tpu.memory_space<vmem>>, vector<8x32xf32>
    %c0_18 = arith.constant 0 : index
    %c0_19 = arith.constant 0 : index
    %46 = vector.load %arg8[%c0_18, %c0_19] : memref<32x128xf32, #tpu.memory_space<vmem>>, vector<32x128xf32>
    %cst_20 = arith.constant dense<0.000000e+00> : vector<8x128xf32>
    %47 = tpu.matmul %43, %46, %cst_20 {dimension_numbers = #tpu.dot_dimension_numbers<[1], [0], [0], [1], [0, 0, 1, 1], [], []>} : vector<8x32xf32>, vector<32x128xf32>, vector<8x128xf32> -> vector<8x128xf32>
    %c0_21 = arith.constant 0 : index
    %c0_22 = arith.constant 0 : index
    %48 = vector.load %arg9[%c0_21, %c0_22] : memref<32x128xf32, #tpu.memory_space<vmem>>, vector<32x128xf32>
    %cst_23 = arith.constant dense<0.000000e+00> : vector<8x128xf32>
    %49 = tpu.matmul %44, %48, %cst_23 {dimension_numbers = #tpu.dot_dimension_numbers<[1], [0], [0], [1], [0, 0, 1, 1], [], []>} : vector<8x32xf32>, vector<32x128xf32>, vector<8x128xf32> -> vector<8x128xf32>
    %50 = arith.addf %47, %49 : vector<8x128xf32>
    %c0_24 = arith.constant 0 : index
    %c0_25 = arith.constant 0 : index
    %51 = vector.load %arg10[%c0_24, %c0_25] : memref<1x128xf32, #tpu.memory_space<vmem>>, vector<1x128xf32>
    %52 = vector.broadcast %51 : vector<1x128xf32> to vector<8x128xf32>
    %53 = arith.addf %50, %52 : vector<8x128xf32>
    %54 = arith.addf %53, %53 : vector<8x128xf32>
    %55 = arith.select %13, %54, %53 : vector<8x128xi1>, vector<8x128xf32>
    %56 = arith.negf %55 : vector<8x128xf32>
    %57 = math.exp %56 : vector<8x128xf32>
    %cst_26 = arith.constant 1.000000e+00 : f32
    %58 = vector.broadcast %cst_26 : f32 to vector<8x128xf32>
    %59 = arith.addf %58, %57 : vector<8x128xf32>
    %60 = arith.divf %58, %59 : vector<8x128xf32>
    %61 = arith.addf %60, %60 : vector<8x128xf32>
    %cst_27 = arith.constant 1.000000e+00 : f32
    %62 = vector.broadcast %cst_27 : f32 to vector<8x128xf32>
    %63 = arith.subf %61, %62 : vector<8x128xf32>
    %64 = arith.select %13, %63, %60 : vector<8x128xi1>, vector<8x128xf32>
    %65 = vector.extract_strided_slice %64 {offsets = [0, 0], sizes = [8, 32], strides = [1, 1]} : vector<8x128xf32> to vector<8x32xf32>
    %66 = vector.extract_strided_slice %64 {offsets = [0, 32], sizes = [8, 32], strides = [1, 1]} : vector<8x128xf32> to vector<8x32xf32>
    %67 = vector.extract_strided_slice %64 {offsets = [0, 64], sizes = [8, 32], strides = [1, 1]} : vector<8x128xf32> to vector<8x32xf32>
    %68 = vector.extract_strided_slice %64 {offsets = [0, 96], sizes = [8, 32], strides = [1, 1]} : vector<8x128xf32> to vector<8x32xf32>
    %69 = arith.mulf %66, %45 : vector<8x32xf32>
    %70 = arith.mulf %65, %67 : vector<8x32xf32>
    %71 = arith.addf %69, %70 : vector<8x32xf32>
    %72 = math.tanh %71 : vector<8x32xf32>
    %73 = arith.mulf %68, %72 : vector<8x32xf32>
    %74 = tpu.concatenate %43, %41, %73, %71 in 1 : vector<8x32xf32>, vector<8x32xf32>, vector<8x32xf32>, vector<8x32xf32> -> vector<8x128xf32>
    %c0_28 = arith.constant 0 : index
    %c0_29 = arith.constant 0 : index
    %75 = vector.load %arg12[%c0_28, %c0_29] : memref<8x128xf32, #tpu.memory_space<vmem>>, vector<8x128xf32>
    tpu.vector_store %arg12[%c0_28, %c0_29], %74 {strides = array<i32>} : memref<8x128xf32, #tpu.memory_space<vmem>>, vector<8x128xf32>,
    %c0_30 = arith.constant 0 : index
    %c0_31 = arith.constant 0 : index
    %76 = vector.load %arg3[%c0_30, %c0_31] : memref<32x128xf32, #tpu.memory_space<vmem>>, vector<32x128xf32>
    %cst_32 = arith.constant dense<0.000000e+00> : vector<8x128xf32>
    %77 = tpu.matmul %73, %76, %cst_32 {dimension_numbers = #tpu.dot_dimension_numbers<[1], [0], [0], [1], [0, 0, 1, 1], [], []>} : vector<8x32xf32>, vector<32x128xf32>, vector<8x128xf32> -> vector<8x128xf32>
    %c0_33 = arith.constant 0 : index
    %c0_34 = arith.constant 0 : index
    %78 = vector.load %arg4[%c0_33, %c0_34] : memref<1x128xf32, #tpu.memory_space<vmem>>, vector<1x128xf32>
    %79 = vector.broadcast %78 : vector<1x128xf32> to vector<8x128xf32>
    %80 = arith.addf %77, %79 : vector<8x128xf32>
    %c0_35 = arith.constant 0 : index
    %c0_36 = arith.constant 0 : index
    %81 = vector.load %arg11[%c0_35, %c0_36] : memref<8x128xf32, #tpu.memory_space<vmem>>, vector<8x128xf32>
    tpu.vector_store %arg11[%c0_35, %c0_36], %80 {strides = array<i32>} : memref<8x128xf32, #tpu.memory_space<vmem>>, vector<8x128xf32>,
    return
  }
}

</mosaic_0001>

<llo_original>
// kernel: decoder_forward.1
$region0: #{decoder_forward.1}
  #allocation0 [shape = 'u32[]', space=smem, size = 0x4, offset = 0x4, fixed_abs, tag = 'smem constant byte address 0x4 - core index']
  #allocation1 [shape = 'u32[144,128]{1,0:T(1,128)}', space=vmem, size = 0x12000, scoped, tag = 'internal scratch']
  %s0 = inlined_call_operand.vmem [shape: s32[8,1], index: 0, kind: input, shape index: {}]
  %s1 = inlined_call_operand.vmem [shape: f32[56,32], index: 1, kind: input, shape index: {}]
  %s2 = inlined_call_operand.vmem [shape: f32[8,128], index: 2, kind: input, shape index: {}, may-alias: {2,12}]
  %s3 = inlined_call_operand.vmem [shape: f32[32,128], index: 3, kind: input, shape index: {}]
  %s4 = inlined_call_operand.vmem [shape: f32[1,128], index: 4, kind: input, shape index: {}]
  %s5 = inlined_call_operand.vmem [shape: f32[32,128], index: 5, kind: input, shape index: {}]
  %s6 = inlined_call_operand.vmem [shape: f32[32,128], index: 6, kind: input, shape index: {}]
  %s7 = inlined_call_operand.vmem [shape: f32[1,128], index: 7, kind: input, shape index: {}]
  %s8 = inlined_call_operand.vmem [shape: f32[32,128], index: 8, kind: input, shape index: {}]
  %s9 = inlined_call_operand.vmem [shape: f32[32,128], index: 9, kind: input, shape index: {}]
  %s10 = inlined_call_operand.vmem [shape: f32[1,128], index: 10, kind: input, shape index: {}]
  %s11 = inlined_call_operand.hbm [shape: f32[8,128], index: 11, kind: output, shape index: {0}]
  %s12 = inlined_call_operand.vmem [shape: f32[8,128], index: 12, kind: output, shape index: {1}, may-alias: {2,12}]
  %13 = xla_tuple %s11, %s12
  %s14 = sld [smem:[#allocation0]]
  $region62: #{decoder_forward.1} parent=0
    _
  %s16 = ssub.s32 1, %s14
  %s17 = scalar_select 0, %s16, %s14
  $region1: #{decoder_forward.1} parent=0
    #allocation2 [shape = 'u8[4096]{0}', space=vmem, size = 0x1000, scoped, tag = 'output window, operand 0, single buffered']
    #allocation3 [shape = 's32[1]{0}', space=sflag, size = 0x4, scoped, tag = 'scoped memory for decoder_forward.1']
    %18 = vsyncpa [#allocation3], 0
    // Predicated region
    $region2: #{decoder_forward.1} parent=1 // pred_check
      _
    $region3: #{decoder_forward.1} parent=1 // pred_check_branch
      %20 = sbr.rel (0) target = $region5
    $region4: #{decoder_forward.1} parent=1 // pred_region
      _
    $region5: #{decoder_forward.1} parent=1 // pred_fallthru
      _
    // Predicated region
    $region6: #{decoder_forward.1} parent=1 // pred_check
      _
    $region7: #{decoder_forward.1} parent=1 // pred_check_branch
      %22 = sbr.rel (0) target = $region9
    $region8: #{decoder_forward.1} parent=1 // pred_region
      _
    $region9: #{decoder_forward.1} parent=1 // pred_fallthru
      _
    // Predicated region
    $region10: #{decoder_forward.1} parent=1 // pred_check
      _
    $region11: #{decoder_forward.1} parent=1 // pred_check_branch
      %24 = sbr.rel (0) target = $region13
    $region12: #{decoder_forward.1} parent=1 // pred_region
      _
    $region13: #{decoder_forward.1} parent=1 // pred_fallthru
      _
    // Predicated region
    $region14: #{decoder_forward.1} parent=1 // pred_check
      _
    $region15: #{decoder_forward.1} parent=1 // pred_check_branch
      %26 = sbr.rel (0) target = $region17
    $region16: #{decoder_forward.1} parent=1 // pred_region
      _
    $region17: #{decoder_forward.1} parent=1 // pred_fallthru
      _
    // Predicated region
    $region18: #{decoder_forward.1} parent=1 // pred_check
      _
    $region19: #{decoder_forward.1} parent=1 // pred_check_branch
      %28 = sbr.rel (0) target = $region21
    $region20: #{decoder_forward.1} parent=1 // pred_region
      _
    $region21: #{decoder_forward.1} parent=1 // pred_fallthru
      _
    // Predicated region
    $region22: #{decoder_forward.1} parent=1 // pred_check
      _
    $region23: #{decoder_forward.1} parent=1 // pred_check_branch
      %30 = sbr.rel (0) target = $region25
    $region24: #{decoder_forward.1} parent=1 // pred_region
      _
    $region25: #{decoder_forward.1} parent=1 // pred_fallthru
      _
    // Predicated region
    $region26: #{decoder_forward.1} parent=1 // pred_check
      _
    $region27: #{decoder_forward.1} parent=1 // pred_check_branch
      %32 = sbr.rel (0) target = $region29
    $region28: #{decoder_forward.1} parent=1 // pred_region
      _
    $region29: #{decoder_forward.1} parent=1 // pred_fallthru
      _
    // Predicated region
    $region30: #{decoder_forward.1} parent=1 // pred_check
      _
    $region31: #{decoder_forward.1} parent=1 // pred_check_branch
      %34 = sbr.rel (0) target = $region33
    $region32: #{decoder_forward.1} parent=1 // pred_region
      _
    $region33: #{decoder_forward.1} parent=1 // pred_fallthru
      _
    // Predicated region
    $region34: #{decoder_forward.1} parent=1 // pred_check
      _
    $region35: #{decoder_forward.1} parent=1 // pred_check_branch
      %36 = sbr.rel (0) target = $region37
    $region36: #{decoder_forward.1} parent=1 // pred_region
      _
    $region37: #{decoder_forward.1} parent=1 // pred_fallthru
      _
    // Predicated region
    $region38: #{decoder_forward.1} parent=1 // pred_check
      _
    $region39: #{decoder_forward.1} parent=1 // pred_check_branch
      %38 = sbr.rel (0) target = $region41
    $region40: #{decoder_forward.1} parent=1 // pred_region
      _
    $region41: #{decoder_forward.1} parent=1 // pred_fallthru
      _
    // Predicated region
    $region42: #{decoder_forward.1} parent=1 // pred_check
      _
    $region43: #{decoder_forward.1} parent=1 // pred_check_branch
      %40 = sbr.rel (0) target = $region45
    $region44: #{decoder_forward.1} parent=1 // pred_region
      _
    $region45: #{decoder_forward.1} parent=1 // pred_fallthru
      _
    %v41 = vld [vmem:[%s0] sm:$0xff]
    %v42 = vlaneseq
    %v43 = vand.u32 %v42, 127
    %44 = vset.pattern.permute.xlu0 0
    %45 = vperm.xlu0 %44, %v41
    %v46 = vpop.permute.xlu0 %45
    %vm47 = vcmp.eq.s32.totalorder %v43, %v46
    %v48 = vsel %vm47, 1, 0
    %v49 = vcvt.s32.f32 %v48
    %v50 = vld [vmem:[%s1] sm:$0xff]
    %v51 = vld [vmem:[%s1 + $0x8] sm:$0xff]
    %v52 = vld [vmem:[%s1 + $0x10] sm:$0xff]
    %v53 = vld [vmem:[%s1 + $0x18] sm:$0xff]
    %v54 = vld [vmem:[%s1 + $0x20] sm:$0xff]
    %v55 = vld [vmem:[%s1 + $0x28] sm:$0xff]
    %v56 = vld [vmem:[%s1 + $0x30] sm:$0xff]
    %vm57 = vcmask 457728
    %v59 = vsel %vm57, %v49, 0
    %61 = vmatprep.subr.mxu0 0.0
    %62 = vmatpush1.msra.mxu0 0.0
    %63 = vmatprep.subr.mxu0 0.0
    %64 = vmatpush1.msra.mxu0 0.0
    %65 = vmatprep.subr.mxu0 0.0
    %66 = vmatpush1.msra.mxu0 0.0
    %67 = vmatprep.subr.mxu0 0.0
    %68 = vmatpush1.msra.mxu0 0.0
    %69 = vmatprep.subr.mxu0 0.0
    %70 = vmatpush1.msra.mxu0 0.0
    %71 = vmatprep.subr.mxu0 0.0
    %72 = vmatpush1.msra.mxu0 0.0
    %73 = vmatprep.subr.mxu0 0.0
    %74 = vmatpush1.msra.mxu0 0.0
    %75 = vmatprep.subr.mxu0 0.0
    %76 = vmatpush1.msra.mxu0 0.0
    %77 = vmatprep.subr.mxu0 0.0
    %78 = vmatpush1.msra.mxu0 0.0
    %79 = vmatprep.subr.mxu0 0.0
    %80 = vmatpush1.msra.mxu0 %v56
    %81 = vmatprep.subr.mxu0 0.0
    %82 = vmatpush1.msra.mxu0 %v55
    %83 = vmatprep.subr.mxu0 0.0
    %84 = vmatpush1.msra.mxu0 %v54
    %85 = vmatprep.subr.mxu0 0.0
    %86 = vmatpush1.msra.mxu0 %v53
    %87 = vmatprep.subr.mxu0 0.0
    %88 = vmatpush1.msra.mxu0 %v52
    %89 = vmatprep.subr.mxu0 0.0
    %90 = vmatpush1.msra.mxu0 %v51
    %91 = vmatprep.subr.mxu0 0.0
    %92 = vmatpush1.msra.mxu0 %v50
    %93 = vmatprep.subr.mxu0 0.0
    %94 = vmatpush2.msra.mxu0 0.0
    %95 = vmatprep.subr.mxu0 0.0
    %96 = vmatpush2.msra.mxu0 0.0
    %97 = vmatprep.subr.mxu0 0.0
    %98 = vmatpush2.msra.mxu0 0.0
    %99 = vmatprep.subr.mxu0 0.0
    %100 = vmatpush2.msra.mxu0 0.0
    %101 = vmatprep.subr.mxu0 0.0
    %102 = vmatpush2.msra.mxu0 0.0
    %103 = vmatprep.subr.mxu0 0.0
    %104 = vmatpush2.msra.mxu0 0.0
    %105 = vmatprep.subr.mxu0 0.0
    %106 = vmatpush2.msra.mxu0 0.0
    %107 = vmatprep.subr.mxu0 0.0
    %108 = vmatpush2.msra.mxu0 0.0
    %109 = vmatprep.subr.mxu0 0.0
    %110 = vmatpush2.msra.mxu0 0.0
    %111 = vmatprep.subr.mxu0 0.0
    %112 = vmatpush2.msra.mxu0 0.0
    %113 = vmatprep.subr.mxu0 0.0
    %114 = vmatpush2.msra.mxu0 0.0
    %115 = vmatprep.subr.mxu0 0.0
    %116 = vmatpush2.msra.mxu0 0.0
    %117 = vmatprep.subr.mxu0 0.0
    %118 = vmatpush2.msra.mxu0 0.0
    %119 = vmatprep.subr.mxu0 0.0
    %120 = vmatpush2.msra.mxu0 0.0
    %121 = vmatprep.subr.mxu0 0.0
    %122 = vmatpush2.msra.mxu0 0.0
    %123 = vmatprep.subr.mxu0 0.0
    %124 = vmatpush2.msra.mxu0 0.0
    %125 = vmatprep.mubr.f32.mxu0 0.0
    %126 = vmatmul.mubr.f32.gmra.mxu0 %v59
    %v127 = vpop.f32.mrf.mxu0
    %v128 = vadd.f32 0.0, %v127
    %v129 = vpop.f32.mrf.mxu0
    %130 = vdwg.mxu0
    %vm131 = vcmp.ge.s32.totalorder %v43, 64
    %vm132 = vcmp.lt.s32.totalorder %v43, 96
    %vm133 = vmand %vm131, %vm132
    %v134 = vld [vmem:[%s2] sm:$0xff]
    %v135 = vld [vmem:[%s5] sm:$0xff]
    %v136 = vld [vmem:[%s5 + $0x8] sm:$0xff]
    %v137 = vld [vmem:[%s5 + $0x10] sm:$0xff]
    %v138 = vld [vmem:[%s5 + $0x18] sm:$0xff]
    %v139 = vld [vmem:[%s6] sm:$0xff]
    %v140 = vld [vmem:[%s6 + $0x8] sm:$0xff]
    %v141 = vld [vmem:[%s6 + $0x10] sm:$0xff]
    %v142 = vld [vmem:[%s6 + $0x18] sm:$0xff]
    %vm143 = vcmask 261120
    %v145 = vsel %vm143, %v134, 0
    %147 = vmatprep.subr.mxu0 0.0
    %148 = vmatpush1.msra.mxu0 0.0
    %149 = vmatprep.subr.mxu0 0.0
    %150 = vmatpush1.msra.mxu0 0.0
    %151 = vmatprep.subr.mxu0 0.0
    %152 = vmatpush1.msra.mxu0 0.0
    %153 = vmatprep.subr.mxu0 0.0
    %154 = vmatpush1.msra.mxu0 0.0
    %155 = vmatprep.subr.mxu0 0.0
    %156 = vmatpush1.msra.mxu0 0.0
    %157 = vmatprep.subr.mxu0 0.0
    %158 = vmatpush1.msra.mxu0 0.0
    %159 = vmatprep.subr.mxu0 0.0
    %160 = vmatpush1.msra.mxu0 0.0
    %161 = vmatprep.subr.mxu0 0.0
    %162 = vmatpush1.msra.mxu0 0.0
    %163 = vmatprep.subr.mxu0 0.0
    %164 = vmatpush1.msra.mxu0 0.0
    %165 = vmatprep.subr.mxu0 0.0
    %166 = vmatpush1.msra.mxu0 0.0
    %167 = vmatprep.subr.mxu0 0.0
    %168 = vmatpush1.msra.mxu0 0.0
    %169 = vmatprep.subr.mxu0 0.0
    %170 = vmatpush1.msra.mxu0 0.0
    %171 = vmatprep.subr.mxu0 0.0
    %172 = vmatpush1.msra.mxu0 %v142
    %173 = vmatprep.subr.mxu0 0.0
    %174 = vmatpush1.msra.mxu0 %v141
    %175 = vmatprep.subr.mxu0 0.0
    %176 = vmatpush1.msra.mxu0 %v140
    %177 = vmatprep.subr.mxu0 0.0
    %178 = vmatpush1.msra.mxu0 %v139
    %179 = vmatprep.subr.mxu0 0.0
    %180 = vmatpush2.msra.mxu0 0.0
    %181 = vmatprep.subr.mxu0 0.0
    %182 = vmatpush2.msra.mxu0 0.0
    %183 = vmatprep.subr.mxu0 0.0
    %184 = vmatpush2.msra.mxu0 0.0
    %185 = vmatprep.subr.mxu0 0.0
    %186 = vmatpush2.msra.mxu0 0.0
    %187 = vmatprep.subr.mxu0 0.0
    %188 = vmatpush2.msra.mxu0 0.0
    %189 = vmatprep.subr.mxu0 0.0
    %190 = vmatpush2.msra.mxu0 0.0
    %191 = vmatprep.subr.mxu0 0.0
    %192 = vmatpush2.msra.mxu0 0.0
    %193 = vmatprep.subr.mxu0 0.0
    %194 = vmatpush2.msra.mxu0 0.0
    %195 = vmatprep.subr.mxu0 0.0
    %196 = vmatpush2.msra.mxu0 0.0
    %197 = vmatprep.subr.mxu0 0.0
    %198 = vmatpush2.msra.mxu0 0.0
    %199 = vmatprep.subr.mxu0 0.0
    %200 = vmatpush2.msra.mxu0 0.0
    %201 = vmatprep.subr.mxu0 0.0
    %202 = vmatpush2.msra.mxu0 0.0
    %203 = vmatprep.subr.mxu0 0.0
    %204 = vmatpush2.msra.mxu0 0.0
    %205 = vmatprep.subr.mxu0 0.0
    %206 = vmatpush2.msra.mxu0 0.0
    %207 = vmatprep.subr.mxu0 0.0
    %208 = vmatpush2.msra.mxu0 0.0
    %209 = vmatprep.subr.mxu0 0.0
    %210 = vmatpush2.msra.mxu0 0.0
    %211 = vmatprep.mubr.f32.mxu0 0.0
    %212 = vmatmul.mubr.f32.gmra.mxu0 %v145
    %v213 = vpop.f32.mrf.mxu0
    %v214 = vadd.f32 0.0, %v213
    %v215 = vpop.f32.mrf.mxu0
    %216 = vdwg.mxu0
    %v218 = vsel %vm143, %v128, 0
    %220 = vmatprep.subr.mxu0 0.0
    %221 = vmatpush1.msra.mxu0 0.0
    %222 = vmatprep.subr.mxu0 0.0
    %223 = vmatpush1.msra.mxu0 0.0
    %224 = vmatprep.subr.mxu0 0.0
    %225 = vmatpush1.msra.mxu0 0.0
    %226 = vmatprep.subr.mxu0 0.0
    %227 = vmatpush1.msra.mxu0 0.0
    %228 = vmatprep.subr.mxu0 0.0
    %229 = vmatpush1.msra.mxu0 0.0
    %230 = vmatprep.subr.mxu0 0.0
    %231 = vmatpush1.msra.mxu0 0.0
    %232 = vmatprep.subr.mxu0 0.0
    %233 = vmatpush1.msra.mxu0 0.0
    %234 = vmatprep.subr.mxu0 0.0
    %235 = vmatpush1.msra.mxu0 0.0
    %236 = vmatprep.subr.mxu0 0.0
    %237 = vmatpush1.msra.mxu0 0.0
    %238 = vmatprep.subr.mxu0 0.0
    %239 = vmatpush1.msra.mxu0 0.0
    %240 = vmatprep.subr.mxu0 0.0
    %241 = vmatpush1.msra.mxu0 0.0
    %242 = vmatprep.subr.mxu0 0.0
    %243 = vmatpush1.msra.mxu0 0.0
    %244 = vmatprep.subr.mxu0 0.0
    %245 = vmatpush1.msra.mxu0 %v138
    %246 = vmatprep.subr.mxu0 0.0
    %247 = vmatpush1.msra.mxu0 %v137
    %248 = vmatprep.subr.mxu0 0.0
    %249 = vmatpush1.msra.mxu0 %v136
    %250 = vmatprep.subr.mxu0 0.0
    %251 = vmatpush1.msra.mxu0 %v135
    %252 = vmatprep.subr.mxu0 0.0
    %253 = vmatpush2.msra.mxu0 0.0
    %254 = vmatprep.subr.mxu0 0.0
    %255 = vmatpush2.msra.mxu0 0.0
    %256 = vmatprep.subr.mxu0 0.0
    %257 = vmatpush2.msra.mxu0 0.0
    %258 = vmatprep.subr.mxu0 0.0
    %259 = vmatpush2.msra.mxu0 0.0
    %260 = vmatprep.subr.mxu0 0.0
    %261 = vmatpush2.msra.mxu0 0.0
    %262 = vmatprep.subr.mxu0 0.0
    %263 = vmatpush2.msra.mxu0 0.0
    %264 = vmatprep.subr.mxu0 0.0
    %265 = vmatpush2.msra.mxu0 0.0
    %266 = vmatprep.subr.mxu0 0.0
    %267 = vmatpush2.msra.mxu0 0.0
    %268 = vmatprep.subr.mxu0 0.0
    %269 = vmatpush2.msra.mxu0 0.0
    %270 = vmatprep.subr.mxu0 0.0
    %271 = vmatpush2.msra.mxu0 0.0
    %272 = vmatprep.subr.mxu0 0.0
    %273 = vmatpush2.msra.mxu0 0.0
    %274 = vmatprep.subr.mxu0 0.0
    %275 = vmatpush2.msra.mxu0 0.0
    %276 = vmatprep.subr.mxu0 0.0
    %277 = vmatpush2.msra.mxu0 0.0
    %278 = vmatprep.subr.mxu0 0.0
    %279 = vmatpush2.msra.mxu0 0.0
    %280 = vmatprep.subr.mxu0 0.0
    %281 = vmatpush2.msra.mxu0 0.0
    %282 = vmatprep.subr.mxu0 0.0
    %283 = vmatpush2.msra.mxu0 0.0
    %284 = vmatprep.mubr.f32.mxu0 0.0
    %285 = vmatmul.mubr.f32.gmra.mxu0 %v218
    %v286 = vpop.f32.mrf.mxu0
    %v287 = vadd.f32 %v214, %v286
    %v288 = vpop.f32.mrf.mxu0
    %289 = vdwg.mxu0
    %v290 = vld [vmem:[%s7] sm:$0x1]
    %v292 = vlaneseq
    %v293 = vshrl.u32 %v292, 7
    %v294 = vsub.s32 0, %v293
    %v295 = vrot.slane %v290, %v294
    %v297 = vadd.f32 %v287, %v295
    %v298 = vadd.f32 %v297, %v297
    %v299 = vsel %vm133, %v298, %v297
    %v300 = vxor.u32 %v299, 2147483648
    %v301 = vmul.f32 %v300, 1.442695
    %v302 = vpow.pop %v301
    %v303 = vadd.f32 %v302, 1.0
    %v304 = vrcp.pop %v303
    %v305 = vmul.f32 1.0, %v304
    %v306 = vadd.f32 %v305, %v305
    %v307 = vsub.f32 %v306, 1.0
    %v308 = vsel %vm133, %v307, %v305
    %v309 = vmul.f32 %v308, %v134
    %311 = vrot.lane.b32.xlu0 %v308, 64
    %v312 = vpop.permute.xlu0 %311
    %v314 = vmul.f32 %v308, %v312
    %316 = vrot.lane.b32.xlu0 %v314, 32
    %v317 = vpop.permute.xlu0 %316
    %v319 = vadd.f32 %v309, %v317
    %v320 = vtanh.pop %v319
    %322 = vrot.lane.b32.xlu0 %v320, 64
    %v323 = vpop.permute.xlu0 %322
    %v325 = vmul.f32 %v308, %v323
    %v326 = vld [vmem:[%s8] sm:$0xff]
    %v327 = vld [vmem:[%s8 + $0x8] sm:$0xff]
    %v328 = vld [vmem:[%s8 + $0x10] sm:$0xff]
    %v329 = vld [vmem:[%s8 + $0x18] sm:$0xff]
    %v330 = vld [vmem:[%s9] sm:$0xff]
    %v331 = vld [vmem:[%s9 + $0x8] sm:$0xff]
    %v332 = vld [vmem:[%s9 + $0x10] sm:$0xff]
    %v333 = vld [vmem:[%s9 + $0x18] sm:$0xff]
    %334 = vrot.lane.b32.xlu0 %v134, 64
    %v335 = vpop.permute.xlu0 %334
    %v336 = vsel %vm143, %v335, 0
    %338 = vmatprep.subr.mxu0 0.0
    %339 = vmatpush1.msra.mxu0 0.0
    %340 = vmatprep.subr.mxu0 0.0
    %341 = vmatpush1.msra.mxu0 0.0
    %342 = vmatprep.subr.mxu0 0.0
    %343 = vmatpush1.msra.mxu0 0.0
    %344 = vmatprep.subr.mxu0 0.0
    %345 = vmatpush1.msra.mxu0 0.0
    %346 = vmatprep.subr.mxu0 0.0
    %347 = vmatpush1.msra.mxu0 0.0
    %348 = vmatprep.subr.mxu0 0.0
    %349 = vmatpush1.msra.mxu0 0.0
    %350 = vmatprep.subr.mxu0 0.0
    %351 = vmatpush1.msra.mxu0 0.0
    %352 = vmatprep.subr.mxu0 0.0
    %353 = vmatpush1.msra.mxu0 0.0
    %354 = vmatprep.subr.mxu0 0.0
    %355 = vmatpush1.msra.mxu0 0.0
    %356 = vmatprep.subr.mxu0 0.0
    %357 = vmatpush1.msra.mxu0 0.0
    %358 = vmatprep.subr.mxu0 0.0
    %359 = vmatpush1.msra.mxu0 0.0
    %360 = vmatprep.subr.mxu0 0.0
    %361 = vmatpush1.msra.mxu0 0.0
    %362 = vmatprep.subr.mxu0 0.0
    %363 = vmatpush1.msra.mxu0 %v333
    %364 = vmatprep.subr.mxu0 0.0
    %365 = vmatpush1.msra.mxu0 %v332
    %366 = vmatprep.subr.mxu0 0.0
    %367 = vmatpush1.msra.mxu0 %v331
    %368 = vmatprep.subr.mxu0 0.0
    %369 = vmatpush1.msra.mxu0 %v330
    %370 = vmatprep.subr.mxu0 0.0
    %371 = vmatpush2.msra.mxu0 0.0
    %372 = vmatprep.subr.mxu0 0.0
    %373 = vmatpush2.msra.mxu0 0.0
    %374 = vmatprep.subr.mxu0 0.0
    %375 = vmatpush2.msra.mxu0 0.0
    %376 = vmatprep.subr.mxu0 0.0
    %377 = vmatpush2.msra.mxu0 0.0
    %378 = vmatprep.subr.mxu0 0.0
    %379 = vmatpush2.msra.mxu0 0.0
    %380 = vmatprep.subr.mxu0 0.0
    %381 = vmatpush2.msra.mxu0 0.0
    %382 = vmatprep.subr.mxu0 0.0
    %383 = vmatpush2.msra.mxu0 0.0
    %384 = vmatprep.subr.mxu0 0.0
    %385 = vmatpush2.msra.mxu0 0.0
    %386 = vmatprep.subr.mxu0 0.0
    %387 = vmatpush2.msra.mxu0 0.0
    %388 = vmatprep.subr.mxu0 0.0
    %389 = vmatpush2.msra.mxu0 0.0
    %390 = vmatprep.subr.mxu0 0.0
    %391 = vmatpush2.msra.mxu0 0.0
    %392 = vmatprep.subr.mxu0 0.0
    %393 = vmatpush2.msra.mxu0 0.0
    %394 = vmatprep.subr.mxu0 0.0
    %395 = vmatpush2.msra.mxu0 0.0
    %396 = vmatprep.subr.mxu0 0.0
    %397 = vmatpush2.msra.mxu0 0.0
    %398 = vmatprep.subr.mxu0 0.0
    %399 = vmatpush2.msra.mxu0 0.0
    %400 = vmatprep.subr.mxu0 0.0
    %401 = vmatpush2.msra.mxu0 0.0
    %402 = vmatprep.mubr.f32.mxu0 0.0
    %403 = vmatmul.mubr.f32.gmra.mxu0 %v336
    %v404 = vpop.f32.mrf.mxu0
    %v405 = vadd.f32 0.0, %v404
    %v406 = vpop.f32.mrf.mxu0
    %407 = vdwg.mxu0
    %409 = vrot.lane.b32.xlu0 %v325, 32
    %v410 = vpop.permute.xlu0 %409
    %v411 = vsel %vm143, %v410, 0
    %413 = vmatprep.subr.mxu0 0.0
    %414 = vmatpush1.msra.mxu0 0.0
    %415 = vmatprep.subr.mxu0 0.0
    %416 = vmatpush1.msra.mxu0 0.0
    %417 = vmatprep.subr.mxu0 0.0
    %418 = vmatpush1.msra.mxu0 0.0
    %419 = vmatprep.subr.mxu0 0.0
    %420 = vmatpush1.msra.mxu0 0.0
    %421 = vmatprep.subr.mxu0 0.0
    %422 = vmatpush1.msra.mxu0 0.0
    %423 = vmatprep.subr.mxu0 0.0
    %424 = vmatpush1.msra.mxu0 0.0
    %425 = vmatprep.subr.mxu0 0.0
    %426 = vmatpush1.msra.mxu0 0.0
    %427 = vmatprep.subr.mxu0 0.0
    %428 = vmatpush1.msra.mxu0 0.0
    %429 = vmatprep.subr.mxu0 0.0
    %430 = vmatpush1.msra.mxu0 0.0
    %431 = vmatprep.subr.mxu0 0.0
    %432 = vmatpush1.msra.mxu0 0.0
    %433 = vmatprep.subr.mxu0 0.0
    %434 = vmatpush1.msra.mxu0 0.0
    %435 = vmatprep.subr.mxu0 0.0
    %436 = vmatpush1.msra.mxu0 0.0
    %437 = vmatprep.subr.mxu0 0.0
    %438 = vmatpush1.msra.mxu0 %v329
    %439 = vmatprep.subr.mxu0 0.0
    %440 = vmatpush1.msra.mxu0 %v328
    %441 = vmatprep.subr.mxu0 0.0
    %442 = vmatpush1.msra.mxu0 %v327
    %443 = vmatprep.subr.mxu0 0.0
    %444 = vmatpush1.msra.mxu0 %v326
    %445 = vmatprep.subr.mxu0 0.0
    %446 = vmatpush2.msra.mxu0 0.0
    %447 = vmatprep.subr.mxu0 0.0
    %448 = vmatpush2.msra.mxu0 0.0
    %449 = vmatprep.subr.mxu0 0.0
    %450 = vmatpush2.msra.mxu0 0.0
    %451 = vmatprep.subr.mxu0 0.0
    %452 = vmatpush2.msra.mxu0 0.0
    %453 = vmatprep.subr.mxu0 0.0
    %454 = vmatpush2.msra.mxu0 0.0
    %455 = vmatprep.subr.mxu0 0.0
    %456 = vmatpush2.msra.mxu0 0.0
    %457 = vmatprep.subr.mxu0 0.0
    %458 = vmatpush2.msra.mxu0 0.0
    %459 = vmatprep.subr.mxu0 0.0
    %460 = vmatpush2.msra.mxu0 0.0
    %461 = vmatprep.subr.mxu0 0.0
    %462 = vmatpush2.msra.mxu0 0.0
    %463 = vmatprep.subr.mxu0 0.0
    %464 = vmatpush2.msra.mxu0 0.0
    %465 = vmatprep.subr.mxu0 0.0
    %466 = vmatpush2.msra.mxu0 0.0
    %467 = vmatprep.subr.mxu0 0.0
    %468 = vmatpush2.msra.mxu0 0.0
    %469 = vmatprep.subr.mxu0 0.0
    %470 = vmatpush2.msra.mxu0 0.0
    %471 = vmatprep.subr.mxu0 0.0
    %472 = vmatpush2.msra.mxu0 0.0
    %473 = vmatprep.subr.mxu0 0.0
    %474 = vmatpush2.msra.mxu0 0.0
    %475 = vmatprep.subr.mxu0 0.0
    %476 = vmatpush2.msra.mxu0 0.0
    %477 = vmatprep.mubr.f32.mxu0 0.0
    %478 = vmatmul.mubr.f32.gmra.mxu0 %v411
    %v479 = vpop.f32.mrf.mxu0
    %v480 = vadd.f32 %v405, %v479
    %v481 = vpop.f32.mrf.mxu0
    %482 = vdwg.mxu0
    %v483 = vld [vmem:[%s10] sm:$0x1]
    %v485 = vlaneseq
    %v486 = vshrl.u32 %v485, 7
    %v487 = vsub.s32 0, %v486
    %v488 = vrot.slane %v483, %v487
    %v490 = vadd.f32 %v480, %v488
    %v491 = vadd.f32 %v490, %v490
    %v492 = vsel %vm133, %v491, %v490
    %v493 = vxor.u32 %v492, 2147483648
    %v494 = vmul.f32 %v493, 1.442695
    %v495 = vpow.pop %v494
    %v496 = vadd.f32 %v495, 1.0
    %v497 = vrcp.pop %v496
    %v498 = vmul.f32 1.0, %v497
    %v499 = vadd.f32 %v498, %v498
    %v500 = vsub.f32 %v499, 1.0
    %v501 = vsel %vm133, %v500, %v498
    %v503 = vmul.f32 %v501, %v335
    %505 = vrot.lane.b32.xlu0 %v501, 64
    %v506 = vpop.permute.xlu0 %505
    %v508 = vmul.f32 %v501, %v506
    %510 = vrot.lane.b32.xlu0 %v508, 32
    %v511 = vpop.permute.xlu0 %510
    %v513 = vadd.f32 %v503, %v511
    %v514 = vtanh.pop %v513
    %516 = vrot.lane.b32.xlu0 %v514, 64
    %v517 = vpop.permute.xlu0 %516
    %v519 = vmul.f32 %v501, %v517
    %522 = vrot.lane.b32.xlu0 %v519, 96
    %v523 = vpop.permute.xlu0 %522
    %526 = vrot.lane.b32.xlu0 %v513, 64
    %v527 = vpop.permute.xlu0 %526
    %v529 = vsel %vm143, %v410, %v319
    %vm530 = vcmask 523264
    %v531 = vsel %vm530, %v529, %v523
    %vm532 = vcmask 785408
    %v533 = vsel %vm532, %v531, %v527
    %534 = vst [vmem:[%s12] sm:$0xff] %v533
    %v535 = vld [vmem:[%s3] sm:$0xff]
    %v536 = vld [vmem:[%s3 + $0x8] sm:$0xff]
    %v537 = vld [vmem:[%s3 + $0x10] sm:$0xff]
    %v538 = vld [vmem:[%s3 + $0x18] sm:$0xff]
    %v539 = vld [vmem:[%s4] sm:$0x1]
    %v541 = vlaneseq
    %v542 = vshrl.u32 %v541, 7
    %v543 = vsub.s32 0, %v542
    %v544 = vrot.slane %v539, %v543
    %546 = vrot.lane.b32.xlu0 %v519, 32
    %v547 = vpop.permute.xlu0 %546
    %v548 = vsel %vm143, %v547, 0
    %550 = vmatprep.subr.mxu0 0.0
    %551 = vmatpush1.msra.mxu0 0.0
    %552 = vmatprep.subr.mxu0 0.0
    %553 = vmatpush1.msra.mxu0 0.0
    %554 = vmatprep.subr.mxu0 0.0
    %555 = vmatpush1.msra.mxu0 0.0
    %556 = vmatprep.subr.mxu0 0.0
    %557 = vmatpush1.msra.mxu0 0.0
    %558 = vmatprep.subr.mxu0 0.0
    %559 = vmatpush1.msra.mxu0 0.0
    %560 = vmatprep.subr.mxu0 0.0
    %561 = vmatpush1.msra.mxu0 0.0
    %562 = vmatprep.subr.mxu0 0.0
    %563 = vmatpush1.msra.mxu0 0.0
    %564 = vmatprep.subr.mxu0 0.0
    %565 = vmatpush1.msra.mxu0 0.0
    %566 = vmatprep.subr.mxu0 0.0
    %567 = vmatpush1.msra.mxu0 0.0
    %568 = vmatprep.subr.mxu0 0.0
    %569 = vmatpush1.msra.mxu0 0.0
    %570 = vmatprep.subr.mxu0 0.0
    %571 = vmatpush1.msra.mxu0 0.0
    %572 = vmatprep.subr.mxu0 0.0
    %573 = vmatpush1.msra.mxu0 0.0
    %574 = vmatprep.subr.mxu0 0.0
    %575 = vmatpush1.msra.mxu0 %v538
    %576 = vmatprep.subr.mxu0 0.0
    %577 = vmatpush1.msra.mxu0 %v537
    %578 = vmatprep.subr.mxu0 0.0
    %579 = vmatpush1.msra.mxu0 %v536
    %580 = vmatprep.subr.mxu0 0.0
    %581 = vmatpush1.msra.mxu0 %v535
    %582 = vmatprep.subr.mxu0 0.0
    %583 = vmatpush2.msra.mxu0 0.0
    %584 = vmatprep.subr.mxu0 0.0
    %585 = vmatpush2.msra.mxu0 0.0
    %586 = vmatprep.subr.mxu0 0.0
    %587 = vmatpush2.msra.mxu0 0.0
    %588 = vmatprep.subr.mxu0 0.0
    %589 = vmatpush2.msra.mxu0 0.0
    %590 = vmatprep.subr.mxu0 0.0
    %591 = vmatpush2.msra.mxu0 0.0
    %592 = vmatprep.subr.mxu0 0.0
    %593 = vmatpush2.msra.mxu0 0.0
    %594 = vmatprep.subr.mxu0 0.0
    %595 = vmatpush2.msra.mxu0 0.0
    %596 = vmatprep.subr.mxu0 0.0
    %597 = vmatpush2.msra.mxu0 0.0
    %598 = vmatprep.subr.mxu0 0.0
    %599 = vmatpush2.msra.mxu0 0.0
    %600 = vmatprep.subr.mxu0 0.0
    %601 = vmatpush2.msra.mxu0 0.0
    %602 = vmatprep.subr.mxu0 0.0
    %603 = vmatpush2.msra.mxu0 0.0
    %604 = vmatprep.subr.mxu0 0.0
    %605 = vmatpush2.msra.mxu0 0.0
    %606 = vmatprep.subr.mxu0 0.0
    %607 = vmatpush2.msra.mxu0 0.0
    %608 = vmatprep.subr.mxu0 0.0
    %609 = vmatpush2.msra.mxu0 0.0
    %610 = vmatprep.subr.mxu0 0.0
    %611 = vmatpush2.msra.mxu0 0.0
    %612 = vmatprep.subr.mxu0 0.0
    %613 = vmatpush2.msra.mxu0 0.0
    %614 = vmatprep.mubr.f32.mxu0 0.0
    %615 = vmatmul.mubr.f32.gmra.mxu0 %v548
    %v616 = vpop.f32.mrf.mxu0
    %v617 = vadd.f32 %v544, %v616
    %v618 = vpop.f32.mrf.mxu0
    %619 = vdwg.mxu0
    %620 = vst [vmem:[#allocation2] sm:$0xff] %v617
    // Predicated region
    $region46: #{decoder_forward.1} parent=1 // pred_check
      _
    $region47: #{decoder_forward.1} parent=1 // pred_check_branch
      %622 = sbr.rel (0) target = $region49
    $region48: #{decoder_forward.1} parent=1 // pred_region
      %s624 = ssub.s32 128, 128
      %625 = vsyncadd [#allocation3], %s624
      %s627 = sshll.u32 [#allocation2], 4
      %s628 = int_to_ptr.vmem [resolvable:$true] %s627
      %630 = dma.vmem_to_hbm [thread:$0]  %s628, 128, %s11, [#allocation3]
    $region49: #{decoder_forward.1} parent=1 // pred_fallthru
      _
    // Predicated region
    $region50: #{decoder_forward.1} parent=1 // pred_check
      _
    $region51: #{decoder_forward.1} parent=1 // pred_check_branch
      %632 = sbr.rel (0) target = $region53
    $region52: #{decoder_forward.1} parent=1 // pred_region
      _
    $region53: #{decoder_forward.1} parent=1 // pred_fallthru
      _
    // Predicated region
    $region54: #{decoder_forward.1} parent=1 // pred_check
      _
    $region55: #{decoder_forward.1} parent=1 // pred_check_branch
      %634 = sbr.rel (0) target = $region57
    $region56: #{decoder_forward.1} parent=1 // pred_region
      %635 = dma.done [#allocation3], 128
    $region57: #{decoder_forward.1} parent=1 // pred_fallthru
      _
    // Predicated region
    $region58: #{decoder_forward.1} parent=1 // pred_check
      _
    $region59: #{decoder_forward.1} parent=1 // pred_check_branch
      %637 = sbr.rel (0) target = $region61
    $region60: #{decoder_forward.1} parent=1 // pred_region
      _
    $region61: #{decoder_forward.1} parent=1 // pred_fallthru
      _
    %638 = vsyncpa [#allocation3], 1

</llo_original>
